<compile_context>
chip_gen: v5e
topology: v5e:2x2
jax: 0.10.0
libtpu: 0.0.40
codegen_flags: <defaults>
</compile_context>

<pallas_src>
import functools

import jax
import jax.numpy as jnp
from jax import lax
from jax.experimental import pallas as pl
from jax.experimental.pallas import tpu as pltpu


def _layer_router_kernel(x_ref, lx_ref, wx_ref, wl_ref, b1_ref, w2_ref, b2_ref,
                         weights_ref, logits_ref, *, S, B):
    # x_ref/lx_ref: (M, D) with M = S*B (row m -> batch m % B)
    # wx_ref/wl_ref: (D, D) folded first-Linear weights
    # b1_ref: (1, D); w2_ref: (D, 2); b2_ref: (1, 2)
    x = x_ref[...]
    lx = lx_ref[...]

    # First Linear (folded concat) + ReLU: h = relu(x @ Wx + last_x @ Wl + b1)
    h = (jnp.dot(x, wx_ref[...], preferred_element_type=jnp.float32)
         + jnp.dot(lx, wl_ref[...], preferred_element_type=jnp.float32)
         + b1_ref[...])
    h = jnp.maximum(h, 0.0)                                  # (M, D)

    # Mean over S (commutes with the second Linear).  Rows with m % B == b
    # belong to batch b; build the (B, M) averaging mask in-register (no HBM).
    M = S * B
    col_b = lax.broadcasted_iota(jnp.int32, (B, M), 1) % B
    row_b = lax.broadcasted_iota(jnp.int32, (B, M), 0)
    avg = jnp.where(col_b == row_b, jnp.float32(1.0 / S), jnp.float32(0.0))
    hm = jnp.dot(avg, h, preferred_element_type=jnp.float32)  # (B, D)

    # Second Linear (D -> 2) on the already-reduced (B, D) activations.
    logits = jnp.dot(hm, w2_ref[...], preferred_element_type=jnp.float32) + b2_ref[...]  # (B, 2)

    # hard_softmax(logits, dim=-1)
    m = jnp.max(logits, axis=-1, keepdims=True)
    e = jnp.exp(logits - m)
    y_soft = e / jnp.sum(e, axis=-1, keepdims=True)

    iota = lax.broadcasted_iota(jnp.int32, y_soft.shape, y_soft.ndim - 1)
    is_max = y_soft == jnp.max(y_soft, axis=-1, keepdims=True)
    # first occurrence of the max (matches argmax tie-breaking)
    idx = jnp.min(jnp.where(is_max, iota, jnp.int32(2 ** 30)), axis=-1, keepdims=True)
    y_hard = (iota == idx).astype(jnp.float32)
    # y_hard - y_soft.detach() + y_soft  (same forward value)
    weights = y_hard - y_soft + y_soft

    weights_ref[...] = weights
    logits_ref[...] = logits


def prepare_layer_router_params(w1, b1, w2, b2):
    """One-time param preparation: fold the concat into the first Linear and
    reshape biases.  w1: (3D, D) stored (in, out); w2: (D, 2)."""
    D = b1.shape[0]
    wx = w1[:D] + w1[2 * D:]          # weight applied to x      (x and x - last_x terms)
    wl = w1[D:2 * D] - w1[2 * D:]     # weight applied to last_x (last_x and -(x-last_x) terms)
    return (wx, wl, b1.reshape(1, D), w2, b2.reshape(1, 2))


def layer_router_forward(x, last_x, prepared):
    """x, last_x: (S, B, D) float32. Returns (router_weights, router_logits), each (B, 2)."""
    S, B, D = x.shape
    wx, wl, b1_2d, w2, b2_2d = prepared
    M = S * B

    # Free (contiguous) reshapes only — no concat, no synthesized avg matrix.
    x_flat = x.reshape(M, D)
    lx_flat = last_x.reshape(M, D)

    vmem = pl.BlockSpec(memory_space=pltpu.MemorySpace.VMEM)
    out_shapes = (jax.ShapeDtypeStruct((B, 2), jnp.float32),
                  jax.ShapeDtypeStruct((B, 2), jnp.float32))

    flops = 2 * M * D * D * 2 + 2 * B * M * D + 2 * B * D * 2
    bytes_accessed = 4 * (2 * M * D + 2 * D * D + D + 2 * D + 2 + 2 * B * 2)

    weights, logits = pl.pallas_call(
        functools.partial(_layer_router_kernel, S=S, B=B),
        out_shape=out_shapes,
        in_specs=[vmem] * 7,
        out_specs=(vmem, vmem),
        cost_estimate=pl.CostEstimate(flops=flops,
                                      transcendentals=2 * B,
                                      bytes_accessed=bytes_accessed),
    )(x_flat, lx_flat, wx, wl, b1_2d, w2, b2_2d)
    return weights, logits


def _reference_forward(x, last_x, params):
    w1, b1, w2, b2 = params
    cat = jnp.concatenate([x, last_x, x - last_x], axis=-1)
    h = jnp.maximum(cat @ w1 + b1, 0.0)
    logits = h @ w2 + b2
    logits = jnp.mean(logits, axis=0)
    y_soft = jax.nn.softmax(logits, axis=-1)
    idx = jnp.argmax(y_soft, axis=-1)
    y_hard = jax.nn.one_hot(idx, 2, dtype=jnp.float32)
    return y_hard - y_soft + y_soft, logits


if __name__ == "__main__":
    # Small shapes consistent with the module: seq S=8, batch B=2, dim D=32.
    S, B, D = 8, 2, 32
    key = jax.random.PRNGKey(0)
    kx, klx, kw1, kb1, kw2, kb2 = jax.random.split(key, 6)

    x = jax.random.normal(kx, (S, B, D), dtype=jnp.float32)
    last_x = jax.random.normal(klx, (S, B, D), dtype=jnp.float32)

    # Parameters stored as (in, out) so x @ W + b == torch's x @ W^T + b.
    w1 = 0.02 * jax.random.normal(kw1, (3 * D, D), dtype=jnp.float32)
    b1 = 0.02 * jax.random.normal(kb1, (D,), dtype=jnp.float32)
    w2 = 0.02 * jax.random.normal(kw2, (D, 2), dtype=jnp.float32)
    b2 = 0.02 * jax.random.normal(kb2, (2,), dtype=jnp.float32)
    params = (w1, b1, w2, b2)

    prepared = prepare_layer_router_params(w1, b1, w2, b2)  # one-time folding

    weights, logits = layer_router_forward(x, last_x, prepared)
    jax.block_until_ready((weights, logits))

    ref_w, ref_l = _reference_forward(x, last_x, params)
    assert jnp.allclose(logits, ref_l, atol=1e-5, rtol=1e-5)
    assert jnp.allclose(weights, ref_w, atol=1e-5, rtol=1e-5)

    print("KERNEL_OK")
</pallas_src>

<mosaic_0001>
module attributes {stable_mosaic.version = 11 : i64} {
  func.func @_layer_router_kernel(%arg0: memref<16x32xf32, #tpu.memory_space<vmem>>, %arg1: memref<16x32xf32, #tpu.memory_space<vmem>>, %arg2: memref<32x32xf32, #tpu.memory_space<vmem>>, %arg3: memref<32x32xf32, #tpu.memory_space<vmem>>, %arg4: memref<1x32xf32, #tpu.memory_space<vmem>>, %arg5: memref<32x2xf32, #tpu.memory_space<vmem>>, %arg6: memref<1x2xf32, #tpu.memory_space<vmem>>, %arg7: memref<2x2xf32, #tpu.memory_space<vmem>>, %arg8: memref<2x2xf32, #tpu.memory_space<vmem>>) attributes {dimension_semantics = [], scalar_prefetch = 0 : i64, scratch_operands = 0 : i64, tpu.core_type = #tpu.core_type<tc>} {
    %c0 = arith.constant 0 : index
    %c0_0 = arith.constant 0 : index
    %0 = vector.load %arg0[%c0, %c0_0] : memref<16x32xf32, #tpu.memory_space<vmem>>, vector<16x32xf32>
    %c0_1 = arith.constant 0 : index
    %c0_2 = arith.constant 0 : index
    %1 = vector.load %arg1[%c0_1, %c0_2] : memref<16x32xf32, #tpu.memory_space<vmem>>, vector<16x32xf32>
    %c0_3 = arith.constant 0 : index
    %c0_4 = arith.constant 0 : index
    %2 = vector.load %arg2[%c0_3, %c0_4] : memref<32x32xf32, #tpu.memory_space<vmem>>, vector<32x32xf32>
    %cst = arith.constant dense<0.000000e+00> : vector<16x32xf32>
    %3 = tpu.matmul %0, %2, %cst {dimension_numbers = #tpu.dot_dimension_numbers<[1], [0], [0], [1], [0, 0, 1, 1], [], []>} : vector<16x32xf32>, vector<32x32xf32>, vector<16x32xf32> -> vector<16x32xf32>
    %c0_5 = arith.constant 0 : index
    %c0_6 = arith.constant 0 : index
    %4 = vector.load %arg3[%c0_5, %c0_6] : memref<32x32xf32, #tpu.memory_space<vmem>>, vector<32x32xf32>
    %cst_7 = arith.constant dense<0.000000e+00> : vector<16x32xf32>
    %5 = tpu.matmul %1, %4, %cst_7 {dimension_numbers = #tpu.dot_dimension_numbers<[1], [0], [0], [1], [0, 0, 1, 1], [], []>} : vector<16x32xf32>, vector<32x32xf32>, vector<16x32xf32> -> vector<16x32xf32>
    %6 = arith.addf %3, %5 : vector<16x32xf32>
    %c0_8 = arith.constant 0 : index
    %c0_9 = arith.constant 0 : index
    %7 = vector.load %arg4[%c0_8, %c0_9] : memref<1x32xf32, #tpu.memory_space<vmem>>, vector<1x32xf32>
    %8 = vector.broadcast %7 : vector<1x32xf32> to vector<16x32xf32>
    %9 = arith.addf %6, %8 : vector<16x32xf32>
    %cst_10 = arith.constant 0.000000e+00 : f32
    %10 = vector.broadcast %cst_10 : f32 to vector<16x32xf32>
    %11 = arith.maximumf %9, %10 : vector<16x32xf32>
    %12 = tpu.iota {dimensions = array<i32: 1>} : vector<2x16xi32>
    %c2_i32 = arith.constant 2 : i32
    %c0_i32 = arith.constant 0 : i32
    %13 = arith.cmpi eq, %c2_i32, %c0_i32 : i32
    %c1_i32 = arith.constant 1 : i32
    %14 = arith.select %13, %c1_i32, %c2_i32 : i32
    %15 = vector.broadcast %14 : i32 to vector<2x16xi32>
    %16 = arith.remsi %12, %15 : vector<2x16xi32>
    %c0_i32_11 = arith.constant 0 : i32
    %17 = vector.broadcast %c0_i32_11 : i32 to vector<2x16xi32>
    %18 = arith.cmpi ne, %16, %17 : vector<2x16xi32>
    %c0_i32_12 = arith.constant 0 : i32
    %19 = vector.broadcast %c0_i32_12 : i32 to vector<2x16xi32>
    %20 = arith.cmpi slt, %16, %19 : vector<2x16xi32>
    %c0_i32_13 = arith.constant 0 : i32
    %21 = arith.cmpi slt, %14, %c0_i32_13 : i32
    %22 = vector.broadcast %21 : i1 to vector<2x16xi1>
    %23 = vector.broadcast %22 : vector<2x16xi1> to vector<2x16xi1>
    %24 = arith.xori %20, %23 : vector<2x16xi1>
    %25 = arith.andi %24, %18 : vector<2x16xi1>
    %26 = vector.broadcast %14 : i32 to vector<2x16xi32>
    %27 = arith.addi %16, %26 : vector<2x16xi32>
    %28 = arith.select %25, %27, %16 : vector<2x16xi1>, vector<2x16xi32>
    %29 = tpu.iota {dimensions = array<i32: 0>} : vector<2x16xi32>
    %30 = arith.cmpi eq, %28, %29 : vector<2x16xi32>
    %cst_14 = arith.constant 1.250000e-01 : f32
    %cst_15 = arith.constant 0.000000e+00 : f32
    %31 = vector.broadcast %cst_14 : f32 to vector<2x16xf32>
    %32 = vector.broadcast %cst_15 : f32 to vector<2x16xf32>
    %33 = arith.select %30, %31, %32 : vector<2x16xi1>, vector<2x16xf32>
    %cst_16 = arith.constant dense<0.000000e+00> : vector<2x32xf32>
    %34 = tpu.matmul %33, %11, %cst_16 {dimension_numbers = #tpu.dot_dimension_numbers<[1], [0], [0], [1], [0, 0, 1, 1], [], []>} : vector<2x16xf32>, vector<16x32xf32>, vector<2x32xf32> -> vector<2x32xf32>
    %c0_17 = arith.constant 0 : index
    %c0_18 = arith.constant 0 : index
    %35 = vector.load %arg5[%c0_17, %c0_18] : memref<32x2xf32, #tpu.memory_space<vmem>>, vector<32x2xf32>
    %cst_19 = arith.constant dense<0.000000e+00> : vector<2x2xf32>
    %36 = tpu.matmul %34, %35, %cst_19 {dimension_numbers = #tpu.dot_dimension_numbers<[1], [0], [0], [1], [0, 0, 1, 1], [], []>} : vector<2x32xf32>, vector<32x2xf32>, vector<2x2xf32> -> vector<2x2xf32>
    %c0_20 = arith.constant 0 : index
    %c0_21 = arith.constant 0 : index
    %37 = vector.load %arg6[%c0_20, %c0_21] : memref<1x2xf32, #tpu.memory_space<vmem>>, vector<1x2xf32>
    %38 = vector.broadcast %37 : vector<1x2xf32> to vector<2x2xf32>
    %39 = arith.addf %36, %38 : vector<2x2xf32>
    %cst_22 = arith.constant dense<0xFF800000> : vector<2xf32>
    %40 = vector.multi_reduction <maximumf>, %39, %cst_22 [1] : vector<2x2xf32> to vector<2xf32>
    %41 = vector.shape_cast %40 : vector<2xf32> to vector<2x1xf32>
    %42 = vector.broadcast %41 : vector<2x1xf32> to vector<2x2xf32>
    %43 = arith.subf %39, %42 : vector<2x2xf32>
    %44 = math.exp %43 : vector<2x2xf32>
    %cst_23 = arith.constant dense<0.000000e+00> : vector<2xf32>
    %45 = vector.multi_reduction <add>, %44, %cst_23 [1] : vector<2x2xf32> to vector<2xf32>
    %46 = vector.shape_cast %45 : vector<2xf32> to vector<2x1xf32>
    %47 = vector.broadcast %46 : vector<2x1xf32> to vector<2x2xf32>
    %48 = arith.divf %44, %47 : vector<2x2xf32>
    %49 = tpu.iota {dimensions = array<i32: 1>} : vector<2x2xi32>
    %cst_24 = arith.constant dense<0xFF800000> : vector<2xf32>
    %50 = vector.multi_reduction <maximumf>, %48, %cst_24 [1] : vector<2x2xf32> to vector<2xf32>
    %51 = vector.shape_cast %50 : vector<2xf32> to vector<2x1xf32>
    %52 = vector.broadcast %51 : vector<2x1xf32> to vector<2x2xf32>
    %53 = arith.cmpf oeq, %48, %52 : vector<2x2xf32>
    %c1073741824_i32 = arith.constant 1073741824 : i32
    %54 = vector.broadcast %c1073741824_i32 : i32 to vector<2x2xi32>
    %55 = arith.select %53, %49, %54 : vector<2x2xi1>, vector<2x2xi32>
    %cst_25 = arith.constant dense<2147483647> : vector<2xi32>
    %56 = vector.multi_reduction <minsi>, %55, %cst_25 [1] : vector<2x2xi32> to vector<2xi32>
    %57 = vector.shape_cast %56 : vector<2xi32> to vector<2x1xi32>
    %58 = vector.broadcast %57 : vector<2x1xi32> to vector<2x2xi32>
    %59 = arith.cmpi eq, %49, %58 : vector<2x2xi32>
    %60 = arith.extui %59 : vector<2x2xi1> to vector<2x2xi32>
    %61 = arith.sitofp %60 : vector<2x2xi32> to vector<2x2xf32>
    %62 = arith.subf %61, %48 : vector<2x2xf32>
    %63 = arith.addf %62, %48 : vector<2x2xf32>
    %c0_26 = arith.constant 0 : index
    %c0_27 = arith.constant 0 : index
    %64 = vector.load %arg7[%c0_26, %c0_27] : memref<2x2xf32, #tpu.memory_space<vmem>>, vector<2x2xf32>
    tpu.vector_store %arg7[%c0_26, %c0_27], %63 {strides = array<i32>} : memref<2x2xf32, #tpu.memory_space<vmem>>, vector<2x2xf32>,
    %c0_28 = arith.constant 0 : index
    %c0_29 = arith.constant 0 : index
    %65 = vector.load %arg8[%c0_28, %c0_29] : memref<2x2xf32, #tpu.memory_space<vmem>>, vector<2x2xf32>
    tpu.vector_store %arg8[%c0_28, %c0_29], %39 {strides = array<i32>} : memref<2x2xf32, #tpu.memory_space<vmem>>, vector<2x2xf32>,
    return
  }
}

</mosaic_0001>

<llo_original>
// kernel: tpu_custom_call.1
$region0: #{tpu_custom_call.1}
  #allocation0 [shape = 'u32[]', space=smem, size = 0x4, offset = 0x4, fixed_abs, tag = 'smem constant byte address 0x4 - core index']
  #allocation1 [shape = 'u32[72,128]{1,0:T(1,128)}', space=vmem, size = 0x9000, scoped, tag = 'internal scratch']
  %s0 = inlined_call_operand.hbm [shape: f32[16,32], index: 0, kind: input, shape index: {}]
  %s1 = inlined_call_operand.hbm [shape: f32[16,32], index: 1, kind: input, shape index: {}]
  %s2 = inlined_call_operand.vmem [shape: f32[32,32], index: 2, kind: input, shape index: {}]
  %s3 = inlined_call_operand.hbm [shape: f32[32,32], index: 3, kind: input, shape index: {}]
  %s4 = inlined_call_operand.vmem [shape: f32[1,32], index: 4, kind: input, shape index: {}]
  %s5 = inlined_call_operand.vmem [shape: f32[32,2], index: 5, kind: input, shape index: {}]
  %s6 = inlined_call_operand.vmem [shape: f32[1,2], index: 6, kind: input, shape index: {}]
  %s7 = inlined_call_operand.hbm [shape: f32[2,2], index: 7, kind: output, shape index: {0}]
  %s8 = inlined_call_operand.hbm [shape: f32[2,2], index: 8, kind: output, shape index: {1}]
  %9 = xla_tuple %s7, %s8
  %s10 = sld [smem:[#allocation0]]
  $region58: #{tpu_custom_call.1} parent=0
    _
  %s12 = ssub.s32 1, %s10
  %s13 = scalar_select 0, %s12, %s10
  $region1: #{tpu_custom_call.1} parent=0
    #allocation2 [shape = 'u8[8192]{0}', space=vmem, size = 0x2000, scoped, tag = 'input window, operand 0, single buffered']
    #allocation3 [shape = 's32[1]{0}', space=sflag, size = 0x4, scoped, tag = 'scoped memory for tpu_custom_call.1']
    #allocation4 [shape = 's32[1]{0}', space=sflag, size = 0x4, scoped, tag = 'scoped memory for tpu_custom_call.1']
    #allocation5 [shape = 'u8[8192]{0}', space=vmem, size = 0x2000, scoped, tag = 'input window, operand 1, single buffered']
    #allocation6 [shape = 's32[1]{0}', space=sflag, size = 0x4, scoped, tag = 'scoped memory for tpu_custom_call.1']
    #allocation7 [shape = 'u8[16384]{0}', space=vmem, size = 0x4000, scoped, tag = 'input window, operand 3, single buffered']
    #allocation8 [shape = 'u8[1024]{0}', space=vmem, size = 0x400, scoped, tag = 'output window, operand 0, single buffered']
    #allocation9 [shape = 'u8[1024]{0}', space=vmem, size = 0x400, scoped, tag = 'output window, operand 1, single buffered']
    #allocation10 [shape = 's32[1]{0}', space=sflag, size = 0x4, scoped, tag = 'scoped memory for tpu_custom_call.1']
    %14 = vsyncpa [#allocation3], 0
    %15 = vsyncpa [#allocation6], 0
    %16 = vsyncpa [#allocation4], 0
    %17 = vsyncpa [#allocation10], 0
    // Predicated region
    $region2: #{tpu_custom_call.1} parent=1 // pred_check
      _
    $region3: #{tpu_custom_call.1} parent=1 // pred_check_branch
      %19 = sbr.rel (0) target = $region5
    $region4: #{tpu_custom_call.1} parent=1 // pred_region
      %21 = vsyncadd [#allocation3], 0
      %s22 = sshll.u32 %s0, 4
      %s23 = int_to_ptr.hbm [resolvable:$true] %s22
      %s24 = sshll.u32 [#allocation2], 4
      %s25 = int_to_ptr.vmem [resolvable:$true] %s24
      %30 = dma.hbm_to_vmem [thread:$0]  %s23, 256, %s25, [#allocation3], 128, 128, 8
    $region5: #{tpu_custom_call.1} parent=1 // pred_fallthru
      _
    // Predicated region
    $region6: #{tpu_custom_call.1} parent=1 // pred_check
      _
    $region7: #{tpu_custom_call.1} parent=1 // pred_check_branch
      %32 = sbr.rel (0) target = $region9
    $region8: #{tpu_custom_call.1} parent=1 // pred_region
      %34 = vsyncadd [#allocation6], 0
      %s35 = sshll.u32 %s1, 4
      %s36 = int_to_ptr.hbm [resolvable:$true] %s35
      %s37 = sshll.u32 [#allocation5], 4
      %s38 = int_to_ptr.vmem [resolvable:$true] %s37
      %43 = dma.hbm_to_vmem [thread:$0]  %s36, 256, %s38, [#allocation6], 128, 128, 8
    $region9: #{tpu_custom_call.1} parent=1 // pred_fallthru
      _
    // Predicated region
    $region10: #{tpu_custom_call.1} parent=1 // pred_check
      _
    $region11: #{tpu_custom_call.1} parent=1 // pred_check_branch
      %45 = sbr.rel (0) target = $region13
    $region12: #{tpu_custom_call.1} parent=1 // pred_region
      _
    $region13: #{tpu_custom_call.1} parent=1 // pred_fallthru
      _
    // Predicated region
    $region14: #{tpu_custom_call.1} parent=1 // pred_check
      _
    $region15: #{tpu_custom_call.1} parent=1 // pred_check_branch
      %47 = sbr.rel (0) target = $region17
    $region16: #{tpu_custom_call.1} parent=1 // pred_region
      %49 = vsyncadd [#allocation6], 0
      %s50 = sshll.u32 %s3, 4
      %s51 = int_to_ptr.hbm [resolvable:$true] %s50
      %s52 = sshll.u32 [#allocation7], 4
      %s53 = int_to_ptr.vmem [resolvable:$true] %s52
      %58 = dma.hbm_to_vmem [thread:$0]  %s51, 512, %s53, [#allocation6], 128, 128, 8
    $region17: #{tpu_custom_call.1} parent=1 // pred_fallthru
      _
    // Predicated region
    $region18: #{tpu_custom_call.1} parent=1 // pred_check
      _
    $region19: #{tpu_custom_call.1} parent=1 // pred_check_branch
      %60 = sbr.rel (0) target = $region21
    $region20: #{tpu_custom_call.1} parent=1 // pred_region
      _
    $region21: #{tpu_custom_call.1} parent=1 // pred_fallthru
      _
    // Predicated region
    $region22: #{tpu_custom_call.1} parent=1 // pred_check
      _
    $region23: #{tpu_custom_call.1} parent=1 // pred_check_branch
      %62 = sbr.rel (0) target = $region25
    $region24: #{tpu_custom_call.1} parent=1 // pred_region
      _
    $region25: #{tpu_custom_call.1} parent=1 // pred_fallthru
      _
    // Predicated region
    $region26: #{tpu_custom_call.1} parent=1 // pred_check
      _
    $region27: #{tpu_custom_call.1} parent=1 // pred_check_branch
      %64 = sbr.rel (0) target = $region29
    $region28: #{tpu_custom_call.1} parent=1 // pred_region
      _
    $region29: #{tpu_custom_call.1} parent=1 // pred_fallthru
      _
    // Predicated region
    $region30: #{tpu_custom_call.1} parent=1 // pred_check
      _
    $region31: #{tpu_custom_call.1} parent=1 // pred_check_branch
      %66 = sbr.rel (0) target = $region33
    $region32: #{tpu_custom_call.1} parent=1 // pred_region
      %68 = dma.done [#allocation3], 256
    $region33: #{tpu_custom_call.1} parent=1 // pred_fallthru
      _
    // Predicated region
    $region34: #{tpu_custom_call.1} parent=1 // pred_check
      _
    $region35: #{tpu_custom_call.1} parent=1 // pred_check_branch
      %70 = sbr.rel (0) target = $region37
    $region36: #{tpu_custom_call.1} parent=1 // pred_region
      %72 = dma.done [#allocation6], 256
    $region37: #{tpu_custom_call.1} parent=1 // pred_fallthru
      _
    // Predicated region
    $region38: #{tpu_custom_call.1} parent=1 // pred_check
      _
    $region39: #{tpu_custom_call.1} parent=1 // pred_check_branch
      %74 = sbr.rel (0) target = $region41
    $region40: #{tpu_custom_call.1} parent=1 // pred_region
      %76 = dma.done [#allocation6], 512
    $region41: #{tpu_custom_call.1} parent=1 // pred_fallthru
      _
    %v77 = vld [vmem:[#allocation2] sm:$0xff]
    %v78 = vld [vmem:[#allocation2 + $0x8] sm:$0xff]
    %v79 = vld [vmem:[#allocation5] sm:$0xff]
    %v80 = vld [vmem:[#allocation5 + $0x8] sm:$0xff]
    %v81 = vld [vmem:[%s2] sm:$0xff]
    %v82 = vld [vmem:[%s2 + $0x8] sm:$0xff]
    %v83 = vld [vmem:[%s2 + $0x10] sm:$0xff]
    %v84 = vld [vmem:[%s2 + $0x18] sm:$0xff]
    %v85 = vld [vmem:[#allocation7] sm:$0xff]
    %v86 = vld [vmem:[#allocation7 + $0x8] sm:$0xff]
    %v87 = vld [vmem:[#allocation7 + $0x10] sm:$0xff]
    %v88 = vld [vmem:[#allocation7 + $0x18] sm:$0xff]
    %vm89 = vcmask 261120
    %v91 = vsel %vm89, %v79, 0
    %v94 = vsel %vm89, %v80, 0
    %96 = vmatpush.msra.mxu0 0.0
    %97 = vmatpush.msra.mxu0 0.0
    %98 = vmatpush.msra.mxu0 0.0
    %99 = vmatpush.msra.mxu0 0.0
    %100 = vmatpush.msra.mxu0 0.0
    %101 = vmatpush.msra.mxu0 0.0
    %102 = vmatpush.msra.mxu0 0.0
    %103 = vmatpush.msra.mxu0 0.0
    %104 = vmatpush.msra.mxu0 0.0
    %105 = vmatpush.msra.mxu0 0.0
    %106 = vmatpush.msra.mxu0 0.0
    %107 = vmatpush.msra.mxu0 0.0
    %108 = vmatpush.msra.mxu0 %v88
    %109 = vmatpush.msra.mxu0 %v87
    %110 = vmatpush.msra.mxu0 %v86
    %111 = vmatpush.msra.mxu0 %v85
    %112 = vmatmul.f32.gmra.mxu0 %v91
    %v113 = vpop.f32.mrf.mxu0
    %v114 = vadd.f32 0.0, %v113
    %115 = vmatmul.f32.gmra.mxu0 %v94
    %v116 = vpop.f32.mrf.mxu0
    %v117 = vadd.f32 0.0, %v116
    %118 = vdwg.mxu0
    %v120 = vsel %vm89, %v77, 0
    %v123 = vsel %vm89, %v78, 0
    %125 = vmatpush.msra.mxu0 0.0
    %126 = vmatpush.msra.mxu0 0.0
    %127 = vmatpush.msra.mxu0 0.0
    %128 = vmatpush.msra.mxu0 0.0
    %129 = vmatpush.msra.mxu0 0.0
    %130 = vmatpush.msra.mxu0 0.0
    %131 = vmatpush.msra.mxu0 0.0
    %132 = vmatpush.msra.mxu0 0.0
    %133 = vmatpush.msra.mxu0 0.0
    %134 = vmatpush.msra.mxu0 0.0
    %135 = vmatpush.msra.mxu0 0.0
    %136 = vmatpush.msra.mxu0 0.0
    %137 = vmatpush.msra.mxu0 %v84
    %138 = vmatpush.msra.mxu0 %v83
    %139 = vmatpush.msra.mxu0 %v82
    %140 = vmatpush.msra.mxu0 %v81
    %141 = vmatmul.f32.gmra.mxu0 %v120
    %v142 = vpop.f32.mrf.mxu0
    %v143 = vadd.f32 %v114, %v142
    %144 = vmatmul.f32.gmra.mxu0 %v123
    %v145 = vpop.f32.mrf.mxu0
    %v146 = vadd.f32 %v117, %v145
    %147 = vdwg.mxu0
    %v148 = vld [vmem:[%s4] sm:$0x1]
    %v150 = vperm.slane %v148, 0
    %v152 = vadd.f32 %v143, %v150
    %v153 = vadd.f32 %v146, %v150
    %v154 = vmax.f32 %v152, 0.0
    %v155 = vmax.f32 %v153, 0.0
    %v156 = vlaneseq
    %v157 = vand.u32 %v156, 127
    %vm158 = vcmp.lt.s32.totalorder %v157, 0
    %v159 = vsub.s32 0, %v157
    %v160 = vsel %vm158, %v159, %v157
    %v161 = vshrl.u32 %v160, 1
    %v162 = vand.u32 %v160, 1
    %v163 = vsub.s32 0, %v162
    %v164 = vsel %vm158, %v163, %v162
    %vm165 = vcmp.ne.s32.totalorder %v164, 0
    %vm166 = vcmp.lt.s32.totalorder %v164, 0
    %vm167 = vmand %vm166, %vm165
    %v168 = vadd.s32 %v164, 2
    %v169 = vsel %vm167, %v168, %v164
    %v170 = vlaneseq
    %v171 = vshrl.u32 %v170, 7
    %vm172 = vcmp.eq.s32.totalorder %v169, %v171
    %v173 = vsel %vm172, 0.125, 0.0
    %vm174 = vcmask 130048
    %v176 = vsel %vm174, %v173, 0
    %178 = vmatpush.msra.mxu0 0.0
    %179 = vmatpush.msra.mxu0 0.0
    %180 = vmatpush.msra.mxu0 0.0
    %181 = vmatpush.msra.mxu0 0.0
    %182 = vmatpush.msra.mxu0 0.0
    %183 = vmatpush.msra.mxu0 0.0
    %184 = vmatpush.msra.mxu0 0.0
    %185 = vmatpush.msra.mxu0 0.0
    %186 = vmatpush.msra.mxu0 0.0
    %187 = vmatpush.msra.mxu0 0.0
    %188 = vmatpush.msra.mxu0 0.0
    %189 = vmatpush.msra.mxu0 0.0
    %190 = vmatpush.msra.mxu0 0.0
    %191 = vmatpush.msra.mxu0 0.0
    %192 = vmatpush.msra.mxu0 %v155
    %193 = vmatpush.msra.mxu0 %v154
    %194 = vmatmul.f32.gmra.mxu0 %v176
    %v195 = vpop.f32.mrf.mxu0
    %v196 = vadd.f32 0.0, %v195
    %197 = vdwg.mxu0
    %v198 = vld [vmem:[%s5] sm:$0xff]
    %v199 = vld [vmem:[%s5 + $0x8] sm:$0xff]
    %v200 = vld [vmem:[%s5 + $0x10] sm:$0xff]
    %v201 = vld [vmem:[%s5 + $0x18] sm:$0xff]
    %v202 = vld [vmem:[%s6] sm:$0x1]
    %v204 = vperm.slane %v202, 0
    %v207 = vsel %vm89, %v196, 0
    %209 = vmatpush.msra.mxu0 0.0
    %210 = vmatpush.msra.mxu0 0.0
    %211 = vmatpush.msra.mxu0 0.0
    %212 = vmatpush.msra.mxu0 0.0
    %213 = vmatpush.msra.mxu0 0.0
    %214 = vmatpush.msra.mxu0 0.0
    %215 = vmatpush.msra.mxu0 0.0
    %216 = vmatpush.msra.mxu0 0.0
    %217 = vmatpush.msra.mxu0 0.0
    %218 = vmatpush.msra.mxu0 0.0
    %219 = vmatpush.msra.mxu0 0.0
    %220 = vmatpush.msra.mxu0 0.0
    %221 = vmatpush.msra.mxu0 %v201
    %222 = vmatpush.msra.mxu0 %v200
    %223 = vmatpush.msra.mxu0 %v199
    %224 = vmatpush.msra.mxu0 %v198
    %225 = vmatmul.f32.gmra.mxu0 %v207
    %v226 = vpop.f32.mrf.mxu0
    %v227 = vadd.f32 %v204, %v226
    %228 = vdwg.mxu0
    %vm229 = vcmask 9216
    %v230 = vsel %vm229, %v227, -inf
    %231 = vmax.xlane.f32.xlu0 %v230
    %v232 = vpop.xlane.xlu0 %231
    %v233 = vsub.f32 %v227, %v232
    %v234 = vmul.f32 %v233, 1.442695
    %v235 = vpow.pop %v234
    %v236 = vsel %vm229, %v235, 0.0
    %237 = vadd.xlane.f32.xlu0 %v236
    %v238 = vpop.xlane.xlu0 %237
    %v239 = vrcp.pop %v238
    %v240 = vmul.f32 %v238, %v239
    %v241 = vsub.f32 1.0, %v240
    %v242 = vmul.f32 %v239, %v241
    %v243 = vadd.f32 %v239, %v242
    %vm244 = vweird.f32 %v238
    %vm245 = vweird.f32 %v239
    %vm246 = vmor %vm244, %vm245
    %v247 = vsel %vm246, %v239, %v243
    %v248 = vand.u32 2147483647, %v238
    %vm249 = vcmp.eq.f32.partialorder %v248, 8.507059e+37
    %v250 = vand.u32 %v238, 2147483648
    %v251 = vor.u32 1.1754944e-38, %v250
    %v252 = vsel %vm249, %v251, %v247
    %v253 = vmul.f32 %v235, %v252
    %v254 = vsel %vm229, %v253, -inf
    %255 = vmax.xlane.f32.xlu0 %v254
    %v256 = vpop.xlane.xlu0 %255
    %vm257 = vcmp.eq.f32.partialorder %v253, %v256
    %v258 = vsel %vm257, %v157, 1073741824
    %v259 = vsel %vm229, %v258, 2147483647
    %v260 = vand.u32 %v259, 65535
    %v261 = vshra.s32 %v259, 16
    %v262 = vcvt.s32.f32 %v260
    %v263 = vcvt.s32.f32 %v261
    %264 = vmin.xlane.f32.xlu0 %v263
    %v265 = vpop.xlane.xlu0 %264
    %vm266 = vcmp.eq.f32.partialorder %v263, %v265
    %v267 = vsel %vm266, %v262, inf
    %268 = vmin.xlane.f32.xlu0 %v267
    %v269 = vpop.xlane.xlu0 %268
    %v270 = vcvt.f32.s32 %v269
    %v271 = vcvt.f32.s32 %v265
    %v272 = vshll.u32 %v271, 16
    %v273 = vadd.s32 %v272, %v270
    %vm274 = vcmp.eq.s32.totalorder %v157, %v273
    %v275 = vsel %vm274, 1, 0
    %v276 = vcvt.s32.f32 %v275
    %v277 = vsub.f32 %v276, %v253
    %v278 = vadd.f32 %v277, %v253
    %279 = vst.msk [vmem:[#allocation8] sm:$0x3] %vm229, %v278
    %280 = vst.msk [vmem:[#allocation9] sm:$0x3] %vm229, %v227
    // Predicated region
    $region42: #{tpu_custom_call.1} parent=1 // pred_check
      _
    $region43: #{tpu_custom_call.1} parent=1 // pred_check_branch
      %282 = sbr.rel (0) target = $region45
    $region44: #{tpu_custom_call.1} parent=1 // pred_region
      %284 = vsyncadd [#allocation4], 0
      %s286 = sshll.u32 [#allocation8], 4
      %s287 = int_to_ptr.vmem [resolvable:$true] %s286
      %s288 = sshll.u32 %s7, 4
      %s289 = int_to_ptr.hbm [resolvable:$true] %s288
      %291 = dma.vmem_to_hbm [thread:$0]  %s287, 32, %s289, [#allocation4]
    $region45: #{tpu_custom_call.1} parent=1 // pred_fallthru
      _
    // Predicated region
    $region46: #{tpu_custom_call.1} parent=1 // pred_check
      _
    $region47: #{tpu_custom_call.1} parent=1 // pred_check_branch
      %293 = sbr.rel (0) target = $region49
    $region48: #{tpu_custom_call.1} parent=1 // pred_region
      %295 = vsyncadd [#allocation10], 0
      %s297 = sshll.u32 [#allocation9], 4
      %s298 = int_to_ptr.vmem [resolvable:$true] %s297
      %s299 = sshll.u32 %s8, 4
      %s300 = int_to_ptr.hbm [resolvable:$true] %s299
      %302 = dma.vmem_to_hbm [thread:$0]  %s298, 32, %s300, [#allocation10]
    $region49: #{tpu_custom_call.1} parent=1 // pred_fallthru
      _
    // Predicated region
    $region50: #{tpu_custom_call.1} parent=1 // pred_check
      _
    $region51: #{tpu_custom_call.1} parent=1 // pred_check_branch
      %304 = sbr.rel (0) target = $region53
    $region52: #{tpu_custom_call.1} parent=1 // pred_region
      %306 = dma.done [#allocation4], 32
    $region53: #{tpu_custom_call.1} parent=1 // pred_fallthru
      _
    // Predicated region
    $region54: #{tpu_custom_call.1} parent=1 // pred_check
      _
    $region55: #{tpu_custom_call.1} parent=1 // pred_check_branch
      %308 = sbr.rel (0) target = $region57
    $region56: #{tpu_custom_call.1} parent=1 // pred_region
      %310 = dma.done [#allocation10], 32
    $region57: #{tpu_custom_call.1} parent=1 // pred_fallthru
      _
    %311 = vsyncpa [#allocation3], 1
    %312 = vsyncpa [#allocation6], 1
    %313 = vsyncpa [#allocation4], 1
    %314 = vsyncpa [#allocation10], 1

</llo_original>
